<compile_context>
chip_gen: v7x
topology: tpu7x:2x2x1
jax: 0.10.0
libtpu: 0.0.40
codegen_flags: <defaults>
</compile_context>

<pallas_src>
import jax
import jax.numpy as jnp
from jax.experimental import pallas as pl
from jax.experimental.pallas import tpu as pltpu


def flow_matching_loss(x_bcs, noise_bcs, t, params, *, b_blk=None, tile_s=None,
                       target_step_mib=4):
    """x_bcs, noise_bcs: (B, C, S) f32/bf16;  t: (B,) f32;  params: (w1, b1, wt, w2, b2)."""
    w1, b1, wt, w2, b2 = params
    B, C, S = x_bcs.shape
    Hid = w1.shape[0]
    itemsize = jnp.dtype(x_bcs.dtype).itemsize

    # ---- batch fold: smallest divisor of B making b_blk*C a multiple of 8 (full sublanes).
    if b_blk is None:
        b_blk = B
        for d in range(1, B + 1):
            if B % d == 0 and (d * C) % 8 == 0:
                b_blk = d
                break
    assert B % b_blk == 0, (B, b_blk)

    # ---- spatial tile: largest multiple of 128 dividing S that keeps x+noise reads per grid
    # step around `target_step_mib` MiB (amortises the fixed per-step overhead on all gens).
    if tile_s is None:
        bytes_per_col = 2 * b_blk * C * itemsize          # x + noise bytes per spatial column
        want = max(128, ((target_step_mib << 20) // bytes_per_col) // 128 * 128)
        tile_s = min(S, want)
        while S % tile_s != 0:
            tile_s -= 128
    assert tile_s % 128 == 0 and S % tile_s == 0, (S, tile_s)

    num_b_blocks = B // b_blk
    num_s_tiles = S // tile_s
    num_tiles = num_b_blocks * num_s_tiles
    n_chunks = tile_s // 128

    def kernel(t_ref,        # SMEM (B,)                 f32
               x_ref,        # VMEM (b_blk, C, tile_s)   input dtype
               n_ref,        # VMEM (b_blk, C, tile_s)   input dtype
               w1_ref,       # VMEM (Hid, C)             f32  Conv2d(C, Hid, 1) weight
               b1_ref,       # VMEM (Hid, 1)             f32
               wt_ref,       # VMEM (Hid, 1)             f32  time-embedding projection
               w2_ref,       # VMEM (C, Hid)             f32  Conv2d(Hid, C, 1) weight
               b2_ref,       # VMEM (C, 1)               f32
               out_ref):     # VMEM (1, 128)             f32  lane-wise SSE partial
        bb = pl.program_id(0)
        w1v = w1_ref[...]
        b1v = b1_ref[...]
        wtv = wt_ref[...]
        w2v = w2_ref[...]
        b2v = b2_ref[...]

        # Accumulate squared error over the folded batch rows (VPU; huge slack at mem-bound).
        d2_acc = jnp.zeros((C, tile_s), jnp.float32)
        for bi in range(b_blk):                              # static unroll, b_blk is small
            tb = t_ref[bb * b_blk + bi]                      # scalar f32 from SMEM
            x = x_ref[bi].astype(jnp.float32)                # (C, tile_s), lane-dense
            nz = n_ref[bi].astype(jnp.float32)

            # q_sample (reversed-time convention): alphas = 1 - t, sigmas = t
            x_noisy = x * (1.0 - tb) + nz * tb

            # Time embedding is rank-1 -> fuse into bias1 on the VPU (no K=1 MXU matmul).
            bias1 = b1v + tb * wtv                                               # (Hid, 1)
            h = jnp.dot(w1v, x_noisy, preferred_element_type=jnp.float32) + bias1
            h = h * jax.nn.sigmoid(h)                                            # SiLU
            out = jnp.dot(w2v, h, preferred_element_type=jnp.float32) + b2v      # (C, tile_s)

            diff = (nz - x) - out                            # target - model_output
            d2_acc = d2_acc + diff * diff

        # Lane-wise partial: fold 128-wide (lane-aligned) spatial chunks, then the C sublanes,
        # leaving a lane-dense (1, 128) block -> unmasked vst, no full cross-lane reduce.
        acc_cl = jnp.zeros((C, 128), jnp.float32)
        for g in range(n_chunks):                            # static, lane-aligned slices
            acc_cl = acc_cl + d2_acc[:, g * 128:(g + 1) * 128]
        out_ref[...] = jnp.sum(acc_cl, axis=0, keepdims=True)

    # Weights are tiny: constant index_map keeps them resident (fetched once, no per-tile DMA).
    def resident(shape):
        return pl.BlockSpec(shape, lambda b, s: (0, 0))

    # VMEM budget: 2 streams x 2 buffers x block + weights/intermediates slack, capped so the
    # same configuration fits v7x's 64 MiB/TC while v6e/v5e simply have headroom.
    block_bytes = b_blk * C * tile_s * itemsize
    vmem_limit = int(min(64 << 20, max(32 << 20, 5 * block_bytes + (2 << 20))))

    partials = pl.pallas_call(
        kernel,
        out_shape=jax.ShapeDtypeStruct((1, num_tiles * 128), jnp.float32),
        grid_spec=pltpu.PrefetchScalarGridSpec(
            num_scalar_prefetch=0,
            grid=(num_b_blocks, num_s_tiles),
            in_specs=[
                pl.BlockSpec(memory_space=pltpu.MemorySpace.SMEM),          # t (B,) scalars
                pl.BlockSpec((b_blk, C, tile_s), lambda b, s: (b, 0, s)),   # x_start stream
                pl.BlockSpec((b_blk, C, tile_s), lambda b, s: (b, 0, s)),   # noise stream
                resident((Hid, C)),                                         # w1
                resident((Hid, 1)),                                         # b1
                resident((Hid, 1)),                                         # wt
                resident((C, Hid)),                                         # w2
                resident((C, 1)),                                           # b2
            ],
            out_specs=pl.BlockSpec((1, 128),
                                   lambda b, s: (0, b * num_s_tiles + s)),
        ),
        compiler_params=pltpu.CompilerParams(
            dimension_semantics=("parallel", "parallel"),
            vmem_limit_bytes=vmem_limit,
        ),
    )(t, x_bcs, noise_bcs, w1, b1, wt, w2, b2)

    # Each (1, 128) block holds genuine lane partials; total SSE = sum of everything.
    return jnp.sum(partials) / float(B * C * S)


def reference_loss(x_bcs, noise_bcs, t, params):
    """Plain-JAX reference mirroring the PyTorch forward semantics."""
    w1, b1, wt, w2, b2 = params
    x_bcs = x_bcs.astype(jnp.float32)
    noise_bcs = noise_bcs.astype(jnp.float32)
    alpha = (1.0 - t)[:, None, None]
    sigma = t[:, None, None]
    x_noisy = x_bcs * alpha + noise_bcs * sigma
    temb = t[:, None, None] * wt[None]                                     # (B, Hid, 1)
    h = jnp.einsum('hc,bcs->bhs', w1, x_noisy) + b1[None] + temb
    h = h * jax.nn.sigmoid(h)
    out = jnp.einsum('ch,bhs->bcs', w2, h) + b2[None]
    target = noise_bcs - x_bcs
    return jnp.mean((target - out) ** 2)


if __name__ == "__main__":
    # Small shapes consistent with the module's NCHW usage.
    B, C, H, W = 4, 4, 16, 16
    S = H * W
    Hid = 32

    key = jax.random.PRNGKey(0)
    kx, kt, kn, kw1, kb1, kwt, kw2, kb2 = jax.random.split(key, 8)

    # Deterministic synthetic inputs / parameters (no checkpoint loading).
    x_nchw = jax.random.normal(kx, (B, C, H, W), dtype=jnp.float32)
    t = jax.random.uniform(kt, (B,), dtype=jnp.float32)          # TimeSampler('uniform')
    noise_nchw = jax.random.normal(kn, (B, C, H, W), dtype=jnp.float32)

    # Pointwise (1x1-conv) time-conditioned MLP weights in their native PyTorch orientation.
    w1 = 0.1 * jax.random.normal(kw1, (Hid, C), dtype=jnp.float32)    # Conv2d(C, Hid, 1)
    b1 = 0.05 * jax.random.normal(kb1, (Hid, 1), dtype=jnp.float32)
    wt = 0.1 * jax.random.normal(kwt, (Hid, 1), dtype=jnp.float32)    # time-embedding proj
    w2 = 0.1 * jax.random.normal(kw2, (C, Hid), dtype=jnp.float32)    # Conv2d(Hid, C, 1)
    b2 = 0.05 * jax.random.normal(kb2, (C, 1), dtype=jnp.float32)
    params = (w1, b1, wt, w2, b2)

    # NCHW -> (B, C, S): a free reshape (channel-major layout preserved),
    # spatial S becomes the lane-dense dim.
    x_bcs = x_nchw.reshape(B, C, S)
    noise_bcs = noise_nchw.reshape(B, C, S)

    # tile_s=128 here only so the toy problem still exercises a (2, 2) grid (batch fold
    # b_blk=2 -> 8 sublanes); production sizes use the auto tile_s targeting ~4 MiB/step.
    loss = flow_matching_loss(x_bcs, noise_bcs, t, params, tile_s=128)
    loss = jax.block_until_ready(loss)

    ref = reference_loss(x_bcs, noise_bcs, t, params)
    assert jnp.allclose(loss, ref, rtol=1e-4, atol=1e-5), (loss, ref)

    print("KERNEL_OK")
</pallas_src>

<mosaic_0001>
module attributes {stable_mosaic.version = 11 : i64} {
  func.func @kernel(%arg0: i32, %arg1: i32, %arg2: memref<4xf32, #tpu.memory_space<smem>>, %arg3: memref<2x4x128xf32, #tpu.memory_space<vmem>>, %arg4: memref<2x4x128xf32, #tpu.memory_space<vmem>>, %arg5: memref<32x4xf32, #tpu.memory_space<vmem>>, %arg6: memref<32x1xf32, #tpu.memory_space<vmem>>, %arg7: memref<32x1xf32, #tpu.memory_space<vmem>>, %arg8: memref<4x32xf32, #tpu.memory_space<vmem>>, %arg9: memref<4x1xf32, #tpu.memory_space<vmem>>, %arg10: memref<1x128xf32, #tpu.memory_space<vmem>>) attributes {dimension_semantics = [#tpu.dimension_semantics<parallel>, #tpu.dimension_semantics<parallel>], iteration_bounds = array<i64: 2, 2>, scalar_prefetch = 0 : i64, scratch_operands = 0 : i64, tpu.core_type = #tpu.core_type<tc>, window_params = [{transform_indices = @transform_0, window_bounds = array<i64: 4>}, {transform_indices = @transform_1, window_bounds = array<i64: 2, 4, 128>}, {transform_indices = @transform_2, window_bounds = array<i64: 2, 4, 128>}, {pipeline_mode = #tpu.pipeline_mode<synchronous>, transform_indices = @transform_3, window_bounds = array<i64: 32, 4>}, {pipeline_mode = #tpu.pipeline_mode<synchronous>, transform_indices = @transform_4, window_bounds = array<i64: 32, 1>}, {pipeline_mode = #tpu.pipeline_mode<synchronous>, transform_indices = @transform_5, window_bounds = array<i64: 32, 1>}, {pipeline_mode = #tpu.pipeline_mode<synchronous>, transform_indices = @transform_6, window_bounds = array<i64: 4, 32>}, {pipeline_mode = #tpu.pipeline_mode<synchronous>, transform_indices = @transform_7, window_bounds = array<i64: 4, 1>}, {transform_indices = @transform_8, window_bounds = array<i64: 1, 128>}]} {
    %c0 = arith.constant 0 : index
    %c0_0 = arith.constant 0 : index
    %0 = vector.load %arg5[%c0, %c0_0] : memref<32x4xf32, #tpu.memory_space<vmem>>, vector<32x4xf32>
    %c0_1 = arith.constant 0 : index
    %c0_2 = arith.constant 0 : index
    %1 = vector.load %arg6[%c0_1, %c0_2] : memref<32x1xf32, #tpu.memory_space<vmem>>, vector<32x1xf32>
    %c0_3 = arith.constant 0 : index
    %c0_4 = arith.constant 0 : index
    %2 = vector.load %arg7[%c0_3, %c0_4] : memref<32x1xf32, #tpu.memory_space<vmem>>, vector<32x1xf32>
    %c0_5 = arith.constant 0 : index
    %c0_6 = arith.constant 0 : index
    %3 = vector.load %arg8[%c0_5, %c0_6] : memref<4x32xf32, #tpu.memory_space<vmem>>, vector<4x32xf32>
    %c0_7 = arith.constant 0 : index
    %c0_8 = arith.constant 0 : index
    %4 = vector.load %arg9[%c0_7, %c0_8] : memref<4x1xf32, #tpu.memory_space<vmem>>, vector<4x1xf32>
    %cst = arith.constant 0.000000e+00 : f32
    %5 = vector.broadcast %cst : f32 to vector<4x128xf32>
    %c2_i32 = arith.constant 2 : i32
    %6 = arith.muli %arg0, %c2_i32 : i32
    %c0_i32 = arith.constant 0 : i32
    %7 = arith.addi %6, %c0_i32 : i32
    %8 = arith.index_cast %7 : i32 to index
    %9 = memref.load %arg2[%8] : memref<4xf32, #tpu.memory_space<smem>>
    %c0_9 = arith.constant 0 : index
    %c0_10 = arith.constant 0 : index
    %c0_11 = arith.constant 0 : index
    %10 = vector.load %arg3[%c0_9, %c0_10, %c0_11] : memref<2x4x128xf32, #tpu.memory_space<vmem>>, vector<1x4x128xf32>
    %11 = vector.shape_cast %10 : vector<1x4x128xf32> to vector<4x128xf32>
    %c0_12 = arith.constant 0 : index
    %c0_13 = arith.constant 0 : index
    %c0_14 = arith.constant 0 : index
    %12 = vector.load %arg4[%c0_12, %c0_13, %c0_14] : memref<2x4x128xf32, #tpu.memory_space<vmem>>, vector<1x4x128xf32>
    %13 = vector.shape_cast %12 : vector<1x4x128xf32> to vector<4x128xf32>
    %cst_15 = arith.constant 1.000000e+00 : f32
    %14 = arith.subf %cst_15, %9 : f32
    %15 = vector.broadcast %14 : f32 to vector<4x128xf32>
    %16 = arith.mulf %11, %15 : vector<4x128xf32>
    %17 = vector.broadcast %9 : f32 to vector<4x128xf32>
    %18 = arith.mulf %13, %17 : vector<4x128xf32>
    %19 = arith.addf %16, %18 : vector<4x128xf32>
    %20 = vector.broadcast %9 : f32 to vector<32x1xf32>
    %21 = arith.mulf %20, %2 : vector<32x1xf32>
    %22 = arith.addf %1, %21 : vector<32x1xf32>
    %cst_16 = arith.constant dense<0.000000e+00> : vector<32x128xf32>
    %23 = tpu.matmul %0, %19, %cst_16 {dimension_numbers = #tpu.dot_dimension_numbers<[1], [0], [0], [1], [0, 0, 1, 1], [], []>} : vector<32x4xf32>, vector<4x128xf32>, vector<32x128xf32> -> vector<32x128xf32>
    %24 = vector.broadcast %22 : vector<32x1xf32> to vector<32x128xf32>
    %25 = arith.addf %23, %24 : vector<32x128xf32>
    %26 = arith.negf %25 : vector<32x128xf32>
    %27 = math.exp %26 : vector<32x128xf32>
    %cst_17 = arith.constant 1.000000e+00 : f32
    %28 = vector.broadcast %cst_17 : f32 to vector<32x128xf32>
    %29 = arith.addf %28, %27 : vector<32x128xf32>
    %30 = arith.divf %28, %29 : vector<32x128xf32>
    %31 = arith.mulf %25, %30 : vector<32x128xf32>
    %cst_18 = arith.constant dense<0.000000e+00> : vector<4x128xf32>
    %32 = tpu.matmul %3, %31, %cst_18 {dimension_numbers = #tpu.dot_dimension_numbers<[1], [0], [0], [1], [0, 0, 1, 1], [], []>} : vector<4x32xf32>, vector<32x128xf32>, vector<4x128xf32> -> vector<4x128xf32>
    %33 = vector.broadcast %4 : vector<4x1xf32> to vector<4x128xf32>
    %34 = arith.addf %32, %33 : vector<4x128xf32>
    %35 = arith.subf %13, %11 : vector<4x128xf32>
    %36 = arith.subf %35, %34 : vector<4x128xf32>
    %37 = arith.mulf %36, %36 : vector<4x128xf32>
    %38 = arith.addf %5, %37 : vector<4x128xf32>
    %c2_i32_19 = arith.constant 2 : i32
    %39 = arith.muli %arg0, %c2_i32_19 : i32
    %c1_i32 = arith.constant 1 : i32
    %40 = arith.addi %39, %c1_i32 : i32
    %41 = arith.index_cast %40 : i32 to index
    %42 = memref.load %arg2[%41] : memref<4xf32, #tpu.memory_space<smem>>
    %c1 = arith.constant 1 : index
    %c0_20 = arith.constant 0 : index
    %c0_21 = arith.constant 0 : index
    %43 = vector.load %arg3[%c1, %c0_20, %c0_21] : memref<2x4x128xf32, #tpu.memory_space<vmem>>, vector<1x4x128xf32>
    %44 = vector.shape_cast %43 : vector<1x4x128xf32> to vector<4x128xf32>
    %c1_22 = arith.constant 1 : index
    %c0_23 = arith.constant 0 : index
    %c0_24 = arith.constant 0 : index
    %45 = vector.load %arg4[%c1_22, %c0_23, %c0_24] : memref<2x4x128xf32, #tpu.memory_space<vmem>>, vector<1x4x128xf32>
    %46 = vector.shape_cast %45 : vector<1x4x128xf32> to vector<4x128xf32>
    %cst_25 = arith.constant 1.000000e+00 : f32
    %47 = arith.subf %cst_25, %42 : f32
    %48 = vector.broadcast %47 : f32 to vector<4x128xf32>
    %49 = arith.mulf %44, %48 : vector<4x128xf32>
    %50 = vector.broadcast %42 : f32 to vector<4x128xf32>
    %51 = arith.mulf %46, %50 : vector<4x128xf32>
    %52 = arith.addf %49, %51 : vector<4x128xf32>
    %53 = vector.broadcast %42 : f32 to vector<32x1xf32>
    %54 = arith.mulf %53, %2 : vector<32x1xf32>
    %55 = arith.addf %1, %54 : vector<32x1xf32>
    %cst_26 = arith.constant dense<0.000000e+00> : vector<32x128xf32>
    %56 = tpu.matmul %0, %52, %cst_26 {dimension_numbers = #tpu.dot_dimension_numbers<[1], [0], [0], [1], [0, 0, 1, 1], [], []>} : vector<32x4xf32>, vector<4x128xf32>, vector<32x128xf32> -> vector<32x128xf32>
    %57 = vector.broadcast %55 : vector<32x1xf32> to vector<32x128xf32>
    %58 = arith.addf %56, %57 : vector<32x128xf32>
    %59 = arith.negf %58 : vector<32x128xf32>
    %60 = math.exp %59 : vector<32x128xf32>
    %cst_27 = arith.constant 1.000000e+00 : f32
    %61 = vector.broadcast %cst_27 : f32 to vector<32x128xf32>
    %62 = arith.addf %61, %60 : vector<32x128xf32>
    %63 = arith.divf %61, %62 : vector<32x128xf32>
    %64 = arith.mulf %58, %63 : vector<32x128xf32>
    %cst_28 = arith.constant dense<0.000000e+00> : vector<4x128xf32>
    %65 = tpu.matmul %3, %64, %cst_28 {dimension_numbers = #tpu.dot_dimension_numbers<[1], [0], [0], [1], [0, 0, 1, 1], [], []>} : vector<4x32xf32>, vector<32x128xf32>, vector<4x128xf32> -> vector<4x128xf32>
    %66 = vector.broadcast %4 : vector<4x1xf32> to vector<4x128xf32>
    %67 = arith.addf %65, %66 : vector<4x128xf32>
    %68 = arith.subf %46, %44 : vector<4x128xf32>
    %69 = arith.subf %68, %67 : vector<4x128xf32>
    %70 = arith.mulf %69, %69 : vector<4x128xf32>
    %71 = arith.addf %38, %70 : vector<4x128xf32>
    %cst_29 = arith.constant 0.000000e+00 : f32
    %72 = vector.broadcast %cst_29 : f32 to vector<4x128xf32>
    %73 = arith.addf %72, %71 : vector<4x128xf32>
    %cst_30 = arith.constant dense<0.000000e+00> : vector<128xf32>
    %74 = vector.multi_reduction <add>, %73, %cst_30 [0] : vector<4x128xf32> to vector<128xf32>
    %75 = vector.shape_cast %74 : vector<128xf32> to vector<1x128xf32>
    %c0_31 = arith.constant 0 : index
    %c0_32 = arith.constant 0 : index
    %76 = vector.load %arg10[%c0_31, %c0_32] : memref<1x128xf32, #tpu.memory_space<vmem>>, vector<1x128xf32>
    tpu.vector_store %arg10[%c0_31, %c0_32], %75 {strides = array<i32>} : memref<1x128xf32, #tpu.memory_space<vmem>>, vector<1x128xf32>,
    return
  }
  func.func @transform_0(%arg0: i32, %arg1: i32) -> i32 {
    %c0_i32 = arith.constant 0 : i32
    %c0_i32_0 = arith.constant 0 : i32
    return %c0_i32 : i32
  }
  func.func @transform_1(%arg0: i32, %arg1: i32) -> (i32, i32, i32) {
    %c0_i32 = arith.constant 0 : i32
    %c0_i32_0 = arith.constant 0 : i32
    return %arg0, %c0_i32, %arg1 : i32, i32, i32
  }
  func.func @transform_2(%arg0: i32, %arg1: i32) -> (i32, i32, i32) {
    %c0_i32 = arith.constant 0 : i32
    %c0_i32_0 = arith.constant 0 : i32
    return %arg0, %c0_i32, %arg1 : i32, i32, i32
  }
  func.func @transform_3(%arg0: i32, %arg1: i32) -> (i32, i32) {
    %c0_i32 = arith.constant 0 : i32
    %c0_i32_0 = arith.constant 0 : i32
    %c0_i32_1 = arith.constant 0 : i32
    return %c0_i32, %c0_i32_0 : i32, i32
  }
  func.func @transform_4(%arg0: i32, %arg1: i32) -> (i32, i32) {
    %c0_i32 = arith.constant 0 : i32
    %c0_i32_0 = arith.constant 0 : i32
    %c0_i32_1 = arith.constant 0 : i32
    return %c0_i32, %c0_i32_0 : i32, i32
  }
  func.func @transform_5(%arg0: i32, %arg1: i32) -> (i32, i32) {
    %c0_i32 = arith.constant 0 : i32
    %c0_i32_0 = arith.constant 0 : i32
    %c0_i32_1 = arith.constant 0 : i32
    return %c0_i32, %c0_i32_0 : i32, i32
  }
  func.func @transform_6(%arg0: i32, %arg1: i32) -> (i32, i32) {
    %c0_i32 = arith.constant 0 : i32
    %c0_i32_0 = arith.constant 0 : i32
    %c0_i32_1 = arith.constant 0 : i32
    return %c0_i32, %c0_i32_0 : i32, i32
  }
  func.func @transform_7(%arg0: i32, %arg1: i32) -> (i32, i32) {
    %c0_i32 = arith.constant 0 : i32
    %c0_i32_0 = arith.constant 0 : i32
    %c0_i32_1 = arith.constant 0 : i32
    return %c0_i32, %c0_i32_0 : i32, i32
  }
  func.func @transform_8(%arg0: i32, %arg1: i32) -> (i32, i32) {
    %c2_i32 = arith.constant 2 : i32
    %0 = arith.muli %arg0, %c2_i32 : i32
    %1 = arith.addi %0, %arg1 : i32
    %c0_i32 = arith.constant 0 : i32
    %c0_i32_0 = arith.constant 0 : i32
    return %c0_i32, %1 : i32, i32
  }
}

</mosaic_0001>

<llo_original>
// kernel: tpu_custom_call.1
$region0: #{tpu_custom_call.1}
  #allocation0 [shape = 'u32[]', space=smem, size = 0x4, offset = 0x4, fixed_abs, tag = 'smem constant byte address 0x4 - core index']
  #allocation1 [shape = 'u32[144,128]{1,0:T(1,128)}', space=vmem, size = 0x12000, scoped, tag = 'internal scratch']
  %s0 = inlined_call_operand.vmem [shape: f32[4], index: 0, kind: input, shape index: {}]
  %s1 = inlined_call_operand.vmem [shape: f32[4,4,256], index: 1, kind: input, shape index: {}]
  %s2 = inlined_call_operand.vmem [shape: f32[4,4,256], index: 2, kind: input, shape index: {}]
  %s3 = inlined_call_operand.vmem [shape: f32[32,4], index: 3, kind: input, shape index: {}]
  %s4 = inlined_call_operand.vmem [shape: f32[32,1], index: 4, kind: input, shape index: {}]
  %s5 = inlined_call_operand.vmem [shape: f32[32,1], index: 5, kind: input, shape index: {}]
  %s6 = inlined_call_operand.vmem [shape: f32[4,32], index: 6, kind: input, shape index: {}]
  %s7 = inlined_call_operand.vmem [shape: f32[4,1], index: 7, kind: input, shape index: {}]
  %s8 = inlined_call_operand.hbm [shape: f32[1,512], index: 8, kind: output, shape index: {}]
  %s9 = sld [smem:[#allocation0]]
  $region151: #{tpu_custom_call.1} parent=0
    _
  %s11 = ssub.s32 1, %s9
  %s12 = scalar_select 0, %s11, %s9
  $region1: #{tpu_custom_call.1} parent=0
    #allocation2 [shape = 'u8[512]{0}', space=smem, size = 0x200, scoped, tag = 'input window, operand 0, single buffered']
    #allocation3 [shape = 's32[2]{0}', space=sflag, size = 0x8, scoped, tag = 'scoped memory for tpu_custom_call.1']
    #allocation4 [shape = 's32[2]{0}', space=sflag, size = 0x8, scoped, tag = 'scoped memory for tpu_custom_call.1']
    #allocation5 [shape = 'u8[8192]{0}', space=vmem, size = 0x2000, scoped, tag = 'input window, operand 1']
    #allocation6 [shape = 'u8[8192]{0}', space=vmem, size = 0x2000, scoped, tag = 'input window, operand 2']
    #allocation7 [shape = 'u8[1024]{0}', space=vmem, size = 0x400, scoped, tag = 'output window, operand 0']
    %13 = vsyncpa [#allocation4], 0
    %14 = vsyncpa [#allocation3], 0
    %s15 = scalar_lea.sflag [#allocation3], 1
    %16 = vsyncpa %s15, 0
    loop: start=0, step=1, limit=6
    $region2: #{tpu_custom_call.1} parent=1 // loop_pre_header
      _
    $region3: #{tpu_custom_call.1} parent=1 // loop_header
      %s18 = sphi 0, %s22
      %p19 = scmp.ge.s32.totalorder %s18, 6
      %s25 = sphi 0, %s37
      %s26 = sphi 0, %s33
      %s27 = sphi 0, %s25
      %s28 = sphi 0, %s26
      %s29 = sphi 0, %s27
      %s30 = sphi 0, %s28
      %s38 = sphi 0, %s38
      %s40 = sphi 0, %s38
      %s41 = sphi 0, %s40
      %s55 = sphi 0, %s41
      %s63 = sphi 0, %s65
      %s66 = sphi 0, %s63
      %s67 = sphi 0, %s66
      %s83 = sphi 0, %s67
      %s91 = sphi 0, %s93
      %s94 = sphi 0, %s91
      %s95 = sphi 0, %s94
      %s111 = sphi 0, %s95
      %s115 = sphi 0, %s115
      %s117 = sphi 0, %s115
      %s118 = sphi 0, %s117
      %s132 = sphi 0, %s118
      %s136 = sphi 0, %s136
      %s138 = sphi 0, %s136
      %s139 = sphi 0, %s138
      %s153 = sphi 0, %s139
      %s157 = sphi 0, %s157
      %s159 = sphi 0, %s157
      %s160 = sphi 0, %s159
      %s174 = sphi 0, %s160
      %s178 = sphi 0, %s178
      %s180 = sphi 0, %s178
      %s181 = sphi 0, %s180
      %s195 = sphi 0, %s181
      %s199 = sphi 0, %s199
      %s201 = sphi 0, %s199
      %s202 = sphi 0, %s201
      %s216 = sphi 0, %s202
      %s226 = sphi 0, %s228
      %s229 = sphi 0, %s226
      %s230 = sphi 0, %s229
      %s246 = sphi 0, %s230
    $region4: #{tpu_custom_call.1} parent=1 // loop_header_branch
      %21 = sbr.rel (%p19) target = $region8
    $region5: #{tpu_custom_call.1} parent=1 // loop_body
      %s23 = ssub.s32 %s18, 1
      %s24 = ssub.s32 %s18, 2
      %s31 = sadd.s32 1, %s26
      %p32 = scmp.ge.s32.totalorder %s31, 2
      %s33 = scalar_select %p32, 0, %s31
      %s34 = sadd.s32 1, %s25
      %s35 = scalar_select %p32, %s34, %s25
      %p36 = scmp.ge.s32.totalorder %s35, 2
      %s37 = scalar_select %p36, 0, %s35
      %s39 = sadd.s32 %s38, 1
      %p42 = scmp.eq.s32.totalorder %s18, 3
      %p43 = scmp.ne.s32.totalorder %s38, %s40
      %p44 = scmp.eq.s32.totalorder %s18, 0
      %p45 = por %p43, %p44
      %p46 = scmp.ne.s32.totalorder %s38, %s40
      %p47 = scmp.eq.s32.totalorder %s23, 3
      %p48 = por %p46, %p47
      %p49 = scmp.ne.s32.totalorder %s40, %s41
      %p50 = scmp.eq.s32.totalorder %s23, 0
      %p51 = por %p49, %p50
      %p52 = scmp.ne.s32.totalorder %s40, %s41
      %p53 = scmp.eq.s32.totalorder %s24, 3
      %p54 = por %p52, %p53
      %p56 = scmp.ne.s32.totalorder %s41, %s55
      %p57 = scmp.eq.s32.totalorder %s24, 0
      %p58 = por %p56, %p57
      %s59 = ssub.s32 %s25, %s37
      %s60 = ssub.s32 %s26, %s33
      %s61 = sor.u32 %s59, %s60
      %p62 = scmp.eq.s32.totalorder %s61, 0
      %s64 = sadd.s32 %s63, 1
      %s65 = scalar_select %p62, %s63, %s64
      %p68 = pneg %p62
      %p69 = scmp.eq.s32.totalorder %s18, 3
      %p70 = por %p68, %p69
      %p71 = scmp.ne.s32.totalorder %s63, %s66
      %p72 = scmp.eq.s32.totalorder %s18, 0
      %p73 = por %p71, %p72
      %p74 = scmp.ne.s32.totalorder %s63, %s66
      %p75 = scmp.eq.s32.totalorder %s23, 3
      %p76 = por %p74, %p75
      %p77 = scmp.ne.s32.totalorder %s66, %s67
      %p78 = scmp.eq.s32.totalorder %s23, 0
      %p79 = por %p77, %p78
      %p80 = scmp.ne.s32.totalorder %s66, %s67
      %p81 = scmp.eq.s32.totalorder %s24, 3
      %p82 = por %p80, %p81
      %p84 = scmp.ne.s32.totalorder %s67, %s83
      %p85 = scmp.eq.s32.totalorder %s24, 0
      %p86 = por %p84, %p85
      %s87 = ssub.s32 %s25, %s37
      %s88 = ssub.s32 %s26, %s33
      %s89 = sor.u32 %s87, %s88
      %p90 = scmp.eq.s32.totalorder %s89, 0
      %s92 = sadd.s32 %s91, 1
      %s93 = scalar_select %p90, %s91, %s92
      %p96 = pneg %p90
      %p97 = scmp.eq.s32.totalorder %s18, 3
      %p98 = por %p96, %p97
      %p99 = scmp.ne.s32.totalorder %s91, %s94
      %p100 = scmp.eq.s32.totalorder %s18, 0
      %p101 = por %p99, %p100
      %p102 = scmp.ne.s32.totalorder %s91, %s94
      %p103 = scmp.eq.s32.totalorder %s23, 3
      %p104 = por %p102, %p103
      %p105 = scmp.ne.s32.totalorder %s94, %s95
      %p106 = scmp.eq.s32.totalorder %s23, 0
      %p107 = por %p105, %p106
      %p108 = scmp.ne.s32.totalorder %s94, %s95
      %p109 = scmp.eq.s32.totalorder %s24, 3
      %p110 = por %p108, %p109
      %p112 = scmp.ne.s32.totalorder %s95, %s111
      %p113 = scmp.eq.s32.totalorder %s24, 0
      %p114 = por %p112, %p113
      %s116 = sadd.s32 %s115, 1
      %p119 = scmp.eq.s32.totalorder %s18, 3
      %p120 = scmp.ne.s32.totalorder %s115, %s117
      %p121 = scmp.eq.s32.totalorder %s18, 0
      %p122 = por %p120, %p121
      %p123 = scmp.ne.s32.totalorder %s115, %s117
      %p124 = scmp.eq.s32.totalorder %s23, 3
      %p125 = por %p123, %p124
      %p126 = scmp.ne.s32.totalorder %s117, %s118
      %p127 = scmp.eq.s32.totalorder %s23, 0
      %p128 = por %p126, %p127
      %p129 = scmp.ne.s32.totalorder %s117, %s118
      %p130 = scmp.eq.s32.totalorder %s24, 3
      %p131 = por %p129, %p130
      %p133 = scmp.ne.s32.totalorder %s118, %s132
      %p134 = scmp.eq.s32.totalorder %s24, 0
      %p135 = por %p133, %p134
      %s137 = sadd.s32 %s136, 1
      %p140 = scmp.eq.s32.totalorder %s18, 3
      %p141 = scmp.ne.s32.totalorder %s136, %s138
      %p142 = scmp.eq.s32.totalorder %s18, 0
      %p143 = por %p141, %p142
      %p144 = scmp.ne.s32.totalorder %s136, %s138
      %p145 = scmp.eq.s32.totalorder %s23, 3
      %p146 = por %p144, %p145
      %p147 = scmp.ne.s32.totalorder %s138, %s139
      %p148 = scmp.eq.s32.totalorder %s23, 0
      %p149 = por %p147, %p148
      %p150 = scmp.ne.s32.totalorder %s138, %s139
      %p151 = scmp.eq.s32.totalorder %s24, 3
      %p152 = por %p150, %p151
      %p154 = scmp.ne.s32.totalorder %s139, %s153
      %p155 = scmp.eq.s32.totalorder %s24, 0
      %p156 = por %p154, %p155
      %s158 = sadd.s32 %s157, 1
      %p161 = scmp.eq.s32.totalorder %s18, 3
      %p162 = scmp.ne.s32.totalorder %s157, %s159
      %p163 = scmp.eq.s32.totalorder %s18, 0
      %p164 = por %p162, %p163
      %p165 = scmp.ne.s32.totalorder %s157, %s159
      %p166 = scmp.eq.s32.totalorder %s23, 3
      %p167 = por %p165, %p166
      %p168 = scmp.ne.s32.totalorder %s159, %s160
      %p169 = scmp.eq.s32.totalorder %s23, 0
      %p170 = por %p168, %p169
      %p171 = scmp.ne.s32.totalorder %s159, %s160
      %p172 = scmp.eq.s32.totalorder %s24, 3
      %p173 = por %p171, %p172
      %p175 = scmp.ne.s32.totalorder %s160, %s174
      %p176 = scmp.eq.s32.totalorder %s24, 0
      %p177 = por %p175, %p176
      %s179 = sadd.s32 %s178, 1
      %p182 = scmp.eq.s32.totalorder %s18, 3
      %p183 = scmp.ne.s32.totalorder %s178, %s180
      %p184 = scmp.eq.s32.totalorder %s18, 0
      %p185 = por %p183, %p184
      %p186 = scmp.ne.s32.totalorder %s178, %s180
      %p187 = scmp.eq.s32.totalorder %s23, 3
      %p188 = por %p186, %p187
      %p189 = scmp.ne.s32.totalorder %s180, %s181
      %p190 = scmp.eq.s32.totalorder %s23, 0
      %p191 = por %p189, %p190
      %p192 = scmp.ne.s32.totalorder %s180, %s181
      %p193 = scmp.eq.s32.totalorder %s24, 3
      %p194 = por %p192, %p193
      %p196 = scmp.ne.s32.totalorder %s181, %s195
      %p197 = scmp.eq.s32.totalorder %s24, 0
      %p198 = por %p196, %p197
      %s200 = sadd.s32 %s199, 1
      %p203 = scmp.eq.s32.totalorder %s18, 3
      %p204 = scmp.ne.s32.totalorder %s199, %s201
      %p205 = scmp.eq.s32.totalorder %s18, 0
      %p206 = por %p204, %p205
      %p207 = scmp.ne.s32.totalorder %s199, %s201
      %p208 = scmp.eq.s32.totalorder %s23, 3
      %p209 = por %p207, %p208
      %p210 = scmp.ne.s32.totalorder %s201, %s202
      %p211 = scmp.eq.s32.totalorder %s23, 0
      %p212 = por %p210, %p211
      %p213 = scmp.ne.s32.totalorder %s201, %s202
      %p214 = scmp.eq.s32.totalorder %s24, 3
      %p215 = por %p213, %p214
      %p217 = scmp.ne.s32.totalorder %s202, %s216
      %p218 = scmp.eq.s32.totalorder %s24, 0
      %p219 = por %p217, %p218
      %s220 = smul.u32 %s25, 2
      %s221 = sadd.s32 %s220, %s26
      %s222 = smul.u32 %s37, 2
      %s223 = sadd.s32 %s222, %s33
      %s224 = ssub.s32 %s221, %s223
      %p225 = scmp.eq.s32.totalorder %s224, 0
      %s227 = sadd.s32 %s226, 1
      %s228 = scalar_select %p225, %s226, %s227
      %p231 = pneg %p225
      %p232 = scmp.eq.s32.totalorder %s18, 3
      %p233 = por %p231, %p232
      %p234 = scmp.ne.s32.totalorder %s226, %s229
      %p235 = scmp.eq.s32.totalorder %s18, 0
      %p236 = por %p234, %p235
      %p237 = scmp.ne.s32.totalorder %s226, %s229
      %p238 = scmp.eq.s32.totalorder %s23, 3
      %p239 = por %p237, %p238
      %p240 = scmp.ne.s32.totalorder %s229, %s230
      %p241 = scmp.eq.s32.totalorder %s23, 0
      %p242 = por %p240, %p241
      %p243 = scmp.ne.s32.totalorder %s229, %s230
      %p244 = scmp.eq.s32.totalorder %s24, 3
      %p245 = por %p243, %p244
      %p247 = scmp.ne.s32.totalorder %s230, %s246
      %p248 = scmp.eq.s32.totalorder %s24, 0
      %p249 = por %p247, %p248
      %p250 = scmp.le.s32.totalorder 1, %s18
      %p251 = scmp.lt.s32.totalorder %s18, 5
      %p252 = pnand %p250, %p251
      %p253 = pneg %p252
      // Predicated region
      $region9: #{tpu_custom_call.1} parent=5 // pred_check
        _
      $region10: #{tpu_custom_call.1} parent=5 // pred_check_branch
        %255 = sbr.rel (%p252) target = $region12
      $region11: #{tpu_custom_call.1} parent=5 // pred_region
        %s256 = ssub.s32 %s18, 1
        // Predicated region
        $region13: #{tpu_custom_call.1} parent=11 // pred_check
          %p257 = pneg %p51
        $region14: #{tpu_custom_call.1} parent=11 // pred_check_branch
          %259 = sbr.rel (%p257) target = $region16
        $region15: #{tpu_custom_call.1} parent=11 // pred_region
          %s261 = ssub.s32 16, 16
          %262 = vsyncadd [#allocation4], %s261
          %s264 = sshll.u32 %s0, 4
          %s265 = int_to_ptr.vmem [resolvable:$true] %s264
          %267 = dma.vmem_to_smem %s265, 16, [#allocation2], [#allocation4]
        $region16: #{tpu_custom_call.1} parent=11 // pred_fallthru
          _
        // Predicated region
        $region17: #{tpu_custom_call.1} parent=11 // pred_check
          %p268 = pneg %p128
        $region18: #{tpu_custom_call.1} parent=11 // pred_check_branch
          %270 = sbr.rel (%p268) target = $region20
        $region19: #{tpu_custom_call.1} parent=11 // pred_region
          _
        $region20: #{tpu_custom_call.1} parent=11 // pred_fallthru
          _
        // Predicated region
        $region21: #{tpu_custom_call.1} parent=11 // pred_check
          %p271 = pneg %p149
        $region22: #{tpu_custom_call.1} parent=11 // pred_check_branch
          %273 = sbr.rel (%p271) target = $region24
        $region23: #{tpu_custom_call.1} parent=11 // pred_region
          _
        $region24: #{tpu_custom_call.1} parent=11 // pred_fallthru
          _
        // Predicated region
        $region25: #{tpu_custom_call.1} parent=11 // pred_check
          %p274 = pneg %p170
        $region26: #{tpu_custom_call.1} parent=11 // pred_check_branch
          %276 = sbr.rel (%p274) target = $region28
        $region27: #{tpu_custom_call.1} parent=11 // pred_region
          _
        $region28: #{tpu_custom_call.1} parent=11 // pred_fallthru
          _
        // Predicated region
        $region29: #{tpu_custom_call.1} parent=11 // pred_check
          %p277 = pneg %p191
        $region30: #{tpu_custom_call.1} parent=11 // pred_check_branch
          %279 = sbr.rel (%p277) target = $region32
        $region31: #{tpu_custom_call.1} parent=11 // pred_region
          _
        $region32: #{tpu_custom_call.1} parent=11 // pred_fallthru
          _
        // Predicated region
        $region33: #{tpu_custom_call.1} parent=11 // pred_check
          %p280 = pneg %p212
        $region34: #{tpu_custom_call.1} parent=11 // pred_check_branch
          %282 = sbr.rel (%p280) target = $region36
        $region35: #{tpu_custom_call.1} parent=11 // pred_region
          _
        $region36: #{tpu_custom_call.1} parent=11 // pred_fallthru
          _
      $region12: #{tpu_custom_call.1} parent=5 // pred_fallthru
        _
      %p283 = scmp.lt.s32.totalorder %s18, 4
      // Predicated region
      $region37: #{tpu_custom_call.1} parent=5 // pred_check
        %p284 = pneg %p283
      $region38: #{tpu_custom_call.1} parent=5 // pred_check_branch
        %286 = sbr.rel (%p284) target = $region40
      $region39: #{tpu_custom_call.1} parent=5 // pred_region
        // Predicated region
        $region41: #{tpu_custom_call.1} parent=39 // pred_check
          %p287 = pneg %p73
        $region42: #{tpu_custom_call.1} parent=39 // pred_check_branch
          %289 = sbr.rel (%p287) target = $region44
        $region43: #{tpu_custom_call.1} parent=39 // pred_region
          %s290 = sand.u32 %s63, 1
          %s291 = sand.u32 %s63, 1
          %s292 = smul.addr %s291, 8
          %s293 = scalar_lea.vmem [#allocation5], %s292
          %s294 = smul.u32 2, %s25
          %s295 = smul.addr %s294, 2
          %s296 = sadd.s32 %s26, %s295
          %s297 = smul.addr %s296, 4
          %s298 = scalar_lea.vmem %s1, %s297
          // Predicated region
          $region45: #{tpu_custom_call.1} parent=43 // pred_check
            _
          $region46: #{tpu_custom_call.1} parent=43 // pred_check_branch
            %300 = sbr.rel (0) target = $region48
          $region47: #{tpu_custom_call.1} parent=43 // pred_region
            // Predicated region
            $region49: #{tpu_custom_call.1} parent=47 // pred_check
              _
            $region50: #{tpu_custom_call.1} parent=47 // pred_check_branch
              %302 = sbr.rel target = $region52
            $region51: #{tpu_custom_call.1} parent=47 // pred_region
              // Predicated region
              $region64: #{tpu_custom_call.1} parent=51 // pred_check
                _
              $region65: #{tpu_custom_call.1} parent=51 // pred_check_branch
                %319 = sbr.rel (0) target = $region67
              $region66: #{tpu_custom_call.1} parent=51 // pred_region
                loop: start=0, step=1, limit=1
                $region68: #{tpu_custom_call.1} parent=66 // loop_pre_header
                  _
                $region69: #{tpu_custom_call.1} parent=66 // loop_header
                  %s321 = sphi 0, %s325
                  %p322 = scmp.ge.s32.totalorder %s321, 1
                  %s326 = sphi %s298, %s298
                  %s327 = sphi %s293, %s293
                $region70: #{tpu_custom_call.1} parent=66 // loop_header_branch
                  %324 = sbr.rel (%p322) target = $region74
                $region71: #{tpu_custom_call.1} parent=66 // loop_body
                  _
                $region72: #{tpu_custom_call.1} parent=66 // loop_footer
                  %s325 = sadd.s32 1, %s321
                $region73: #{tpu_custom_call.1} parent=66 // loop_footer_branch
                  %320 = sbr.rel target = $region69
                $region74: #{tpu_custom_call.1} parent=66 // loop_exit
                  _
                loop: start=0, step=1, limit=1
                $region75: #{tpu_custom_call.1} parent=66 // loop_pre_header
                  _
                $region76: #{tpu_custom_call.1} parent=66 // loop_header
                  %s330 = sphi 0, %s334
                  %p331 = scmp.ge.s32.totalorder %s330, 1
                  %s335 = sphi %s298, %s298
                  %s336 = sphi %s293, %s293
                $region77: #{tpu_custom_call.1} parent=66 // loop_header_branch
                  %333 = sbr.rel (%p331) target = $region81
                $region78: #{tpu_custom_call.1} parent=66 // loop_body
                  %v337 = vld [vmem:[%s335] sm:$0xf]
                  %338 = vst [vmem:[%s336] sm:$0xf] %v337
                  %v339 = vld [vmem:[%s335 + $0x8] sm:$0xf]
                  %340 = vst [vmem:[%s336 + $0x4] sm:$0xf] %v339
                $region79: #{tpu_custom_call.1} parent=66 // loop_footer
                  %s334 = sadd.s32 1, %s330
                $region80: #{tpu_custom_call.1} parent=66 // loop_footer_branch
                  %329 = sbr.rel target = $region76
                $region81: #{tpu_custom_call.1} parent=66 // loop_exit
                  _
              $region67: #{tpu_custom_call.1} parent=51 // pred_fallthru
                _
            $region52: #{tpu_custom_call.1} parent=47 // pred_fallthru
              _
            // Predicated region
            $region53: #{tpu_custom_call.1} parent=47 // pred_check
              _
            $region54: #{tpu_custom_call.1} parent=47 // pred_check_branch
              %304 = sbr.rel (0) target = $region56
            $region55: #{tpu_custom_call.1} parent=47 // pred_region
              loop: start=0, step=1, limit=1
              $region57: #{tpu_custom_call.1} parent=55 // loop_pre_header
                _
              $region58: #{tpu_custom_call.1} parent=55 // loop_header
                %s307 = sphi 0, %s311
                %p308 = scmp.ge.s32.totalorder %s307, 1
                %s312 = sphi %s298, %s298
                %s313 = sphi %s293, %s293
              $region59: #{tpu_custom_call.1} parent=55 // loop_header_branch
                %310 = sbr.rel (%p308) target = $region63
              $region60: #{tpu_custom_call.1} parent=55 // loop_body
                %v314 = vld [vmem:[%s312] sm:$0xf]
                %315 = vst [vmem:[%s313] sm:$0xf] %v314
                %v316 = vld [vmem:[%s312 + $0x8] sm:$0xf]
                %317 = vst [vmem:[%s313 + $0x4] sm:$0xf] %v316
              $region61: #{tpu_custom_call.1} parent=55 // loop_footer
                %s311 = sadd.s32 1, %s307
              $region62: #{tpu_custom_call.1} parent=55 // loop_footer_branch
                %306 = sbr.rel target = $region58
              $region63: #{tpu_custom_call.1} parent=55 // loop_exit
                _
            $region56: #{tpu_custom_call.1} parent=47 // pred_fallthru
              _
          $region48: #{tpu_custom_call.1} parent=43 // pred_fallthru
            _
          %341 = vnop
        $region44: #{tpu_custom_call.1} parent=39 // pred_fallthru
          _
        // Predicated region
        $region82: #{tpu_custom_call.1} parent=39 // pred_check
          %p342 = pneg %p101
        $region83: #{tpu_custom_call.1} parent=39 // pred_check_branch
          %344 = sbr.rel (%p342) target = $region85
        $region84: #{tpu_custom_call.1} parent=39 // pred_region
          %s345 = sand.u32 %s91, 1
          %s346 = sand.u32 %s91, 1
          %s347 = smul.addr %s346, 8
          %s348 = scalar_lea.vmem [#allocation6], %s347
          %s349 = smul.u32 2, %s25
          %s350 = smul.addr %s349, 2
          %s351 = sadd.s32 %s26, %s350
          %s352 = smul.addr %s351, 4
          %s353 = scalar_lea.vmem %s2, %s352
          // Predicated region
          $region86: #{tpu_custom_call.1} parent=84 // pred_check
            _
          $region87: #{tpu_custom_call.1} parent=84 // pred_check_branch
            %355 = sbr.rel (0) target = $region89
          $region88: #{tpu_custom_call.1} parent=84 // pred_region
            // Predicated region
            $region90: #{tpu_custom_call.1} parent=88 // pred_check
              _
            $region91: #{tpu_custom_call.1} parent=88 // pred_check_branch
              %357 = sbr.rel target = $region93
            $region92: #{tpu_custom_call.1} parent=88 // pred_region
              // Predicated region
              $region105: #{tpu_custom_call.1} parent=92 // pred_check
                _
              $region106: #{tpu_custom_call.1} parent=92 // pred_check_branch
                %374 = sbr.rel (0) target = $region108
              $region107: #{tpu_custom_call.1} parent=92 // pred_region
                loop: start=0, step=1, limit=1
                $region109: #{tpu_custom_call.1} parent=107 // loop_pre_header
                  _
                $region110: #{tpu_custom_call.1} parent=107 // loop_header
                  %s376 = sphi 0, %s380
                  %p377 = scmp.ge.s32.totalorder %s376, 1
                  %s381 = sphi %s353, %s353
                  %s382 = sphi %s348, %s348
                $region111: #{tpu_custom_call.1} parent=107 // loop_header_branch
                  %379 = sbr.rel (%p377) target = $region115
                $region112: #{tpu_custom_call.1} parent=107 // loop_body
                  _
                $region113: #{tpu_custom_call.1} parent=107 // loop_footer
                  %s380 = sadd.s32 1, %s376
                $region114: #{tpu_custom_call.1} parent=107 // loop_footer_branch
                  %375 = sbr.rel target = $region110
                $region115: #{tpu_custom_call.1} parent=107 // loop_exit
                  _
                loop: start=0, step=1, limit=1
                $region116: #{tpu_custom_call.1} parent=107 // loop_pre_header
                  _
                $region117: #{tpu_custom_call.1} parent=107 // loop_header
                  %s385 = sphi 0, %s389
                  %p386 = scmp.ge.s32.totalorder %s385, 1
                  %s390 = sphi %s353, %s353
                  %s391 = sphi %s348, %s348
                $region118: #{tpu_custom_call.1} parent=107 // loop_header_branch
                  %388 = sbr.rel (%p386) target = $region122
                $region119: #{tpu_custom_call.1} parent=107 // loop_body
                  %v392 = vld [vmem:[%s390] sm:$0xf]
                  %393 = vst [vmem:[%s391] sm:$0xf] %v392
                  %v394 = vld [vmem:[%s390 + $0x8] sm:$0xf]
                  %395 = vst [vmem:[%s391 + $0x4] sm:$0xf] %v394
                $region120: #{tpu_custom_call.1} parent=107 // loop_footer
                  %s389 = sadd.s32 1, %s385
                $region121: #{tpu_custom_call.1} parent=107 // loop_footer_branch
                  %384 = sbr.rel target = $region117
                $region122: #{tpu_custom_call.1} parent=107 // loop_exit
                  _
              $region108: #{tpu_custom_call.1} parent=92 // pred_fallthru
                _
            $region93: #{tpu_custom_call.1} parent=88 // pred_fallthru
              _
            // Predicated region
            $region94: #{tpu_custom_call.1} parent=88 // pred_check
              _
            $region95: #{tpu_custom_call.1} parent=88 // pred_check_branch
              %359 = sbr.rel (0) target = $region97
            $region96: #{tpu_custom_call.1} parent=88 // pred_region
              loop: start=0, step=1, limit=1
              $region98: #{tpu_custom_call.1} parent=96 // loop_pre_header
                _
              $region99: #{tpu_custom_call.1} parent=96 // loop_header
                %s362 = sphi 0, %s366
                %p363 = scmp.ge.s32.totalorder %s362, 1
                %s367 = sphi %s353, %s353
                %s368 = sphi %s348, %s348
              $region100: #{tpu_custom_call.1} parent=96 // loop_header_branch
                %365 = sbr.rel (%p363) target = $region104
              $region101: #{tpu_custom_call.1} parent=96 // loop_body
                %v369 = vld [vmem:[%s367] sm:$0xf]
                %370 = vst [vmem:[%s368] sm:$0xf] %v369
                %v371 = vld [vmem:[%s367 + $0x8] sm:$0xf]
                %372 = vst [vmem:[%s368 + $0x4] sm:$0xf] %v371
              $region102: #{tpu_custom_call.1} parent=96 // loop_footer
                %s366 = sadd.s32 1, %s362
              $region103: #{tpu_custom_call.1} parent=96 // loop_footer_branch
                %361 = sbr.rel target = $region99
              $region104: #{tpu_custom_call.1} parent=96 // loop_exit
                _
            $region97: #{tpu_custom_call.1} parent=88 // pred_fallthru
              _
          $region89: #{tpu_custom_call.1} parent=84 // pred_fallthru
            _
          %396 = vnop
        $region85: #{tpu_custom_call.1} parent=39 // pred_fallthru
          _
      $region40: #{tpu_custom_call.1} parent=5 // pred_fallthru
        _
      %p397 = scmp.le.s32.totalorder 1, %s18
      %p398 = scmp.lt.s32.totalorder %s18, 5
      %p399 = pnand %p397, %p398
      %p400 = pneg %p399
      // Predicated region
      $region123: #{tpu_custom_call.1} parent=5 // pred_check
        _
      $region124: #{tpu_custom_call.1} parent=5 // pred_check_branch
        %402 = sbr.rel (%p399) target = $region126
      $region125: #{tpu_custom_call.1} parent=5 // pred_region
        %s403 = ssub.s32 %s18, 1
        // Predicated region
        $region127: #{tpu_custom_call.1} parent=125 // pred_check
          %p404 = pneg %p51
        $region128: #{tpu_custom_call.1} parent=125 // pred_check_branch
          %406 = sbr.rel (%p404) target = $region130
        $region129: #{tpu_custom_call.1} parent=125 // pred_region
          %407 = dma.done [#allocation4], 16
        $region130: #{tpu_custom_call.1} parent=125 // pred_fallthru
          _
        %s408 = sand.u32 %s66, 1
        %s409 = sand.u32 %s66, 1
        %s410 = smul.addr %s409, 8
        %s411 = scalar_lea.vmem [#allocation5], %s410
        // Predicated region
        $region131: #{tpu_custom_call.1} parent=125 // pred_check
          %p412 = pneg %p79
        $region132: #{tpu_custom_call.1} parent=125 // pred_check_branch
          %414 = sbr.rel (%p412) target = $region134
        $region133: #{tpu_custom_call.1} parent=125 // pred_region
          _
        $region134: #{tpu_custom_call.1} parent=125 // pred_fallthru
          _
        %s415 = sand.u32 %s94, 1
        %s416 = sand.u32 %s94, 1
        %s417 = smul.addr %s416, 8
        %s418 = scalar_lea.vmem [#allocation6], %s417
        // Predicated region
        $region135: #{tpu_custom_call.1} parent=125 // pred_check
          %p419 = pneg %p107
        $region136: #{tpu_custom_call.1} parent=125 // pred_check_branch
          %421 = sbr.rel (%p419) target = $region138
        $region137: #{tpu_custom_call.1} parent=125 // pred_region
          _
        $region138: #{tpu_custom_call.1} parent=125 // pred_fallthru
          _
        %422 = sfence
        %p423 = pneg %p51
        %p424 = pneg %p48
        %s425 = sand.u32 %s66, 1
        %s426 = sand.u32 %s66, 1
        %s427 = smul.addr %s426, 8
        %s428 = scalar_lea.vmem [#allocation5], %s427
        %p429 = pneg %p79
        %p430 = pneg %p76
        %s431 = sand.u32 %s94, 1
        %s432 = sand.u32 %s94, 1
        %s433 = smul.addr %s432, 8
        %s434 = scalar_lea.vmem [#allocation6], %s433
        %p435 = pneg %p107
        %p436 = pneg %p104
        %p437 = pneg %p128
        %p438 = pneg %p125
        %p439 = pneg %p149
        %p440 = pneg %p146
        %p441 = pneg %p170
        %p442 = pneg %p167
        %p443 = pneg %p191
        %p444 = pneg %p188
        %p445 = pneg %p212
        %p446 = pneg %p209
        %p447 = pneg %p242
        %p448 = pneg %p239
        %s449 = sand.u32 %s229, 1
        %s450 = scalar_lea.sflag [#allocation3], %s449
        %s451 = sand.u32 %s229, 1
        %s452 = scalar_lea.vmem [#allocation7], %s451
        %s453 = smul.u32 2, %s27
        %s454 = smul.u32 2, %s27
        %s455 = smul.u32 %s27, 2
        %s456 = sadd.s32 %s455, %s28
        %v457 = vld [vmem:[%s3] sm:$0xff]
        %v458 = vld [vmem:[%s3 + $0x8] sm:$0xff]
        %v459 = vld [vmem:[%s3 + $0x10] sm:$0xff]
        %v460 = vld [vmem:[%s3 + $0x18] sm:$0xff]
        %v461 = vld [vmem:[%s4] sm:$0xff]
        %v462 = vld [vmem:[%s4 + $0x8] sm:$0xff]
        %v463 = vld [vmem:[%s4 + $0x10] sm:$0xff]
        %v464 = vld [vmem:[%s4 + $0x18] sm:$0xff]
        %v465 = vld [vmem:[%s5] sm:$0xff]
        %v466 = vld [vmem:[%s5 + $0x8] sm:$0xff]
        %v467 = vld [vmem:[%s5 + $0x10] sm:$0xff]
        %v468 = vld [vmem:[%s5 + $0x18] sm:$0xff]
        %v469 = vld [vmem:[%s6] sm:$0xf]
        %v470 = vld [vmem:[%s7] sm:$0xf]
        %s471 = smul.u32 %s27, 2
        %s472 = sld [smem:[#allocation2 + %s471]]
        %v473 = vld [vmem:[%s411] sm:$0xf]
        %v474 = vld [vmem:[%s418] sm:$0xf]
        %s475 = ssub.f32 1.0, %s472
        %v476 = vstv %s475
        %v477 = vmul.f32 %v473, %v476
        %v478 = vstv %s472
        %v479 = vmul.f32 %v474, %v478
        %v480 = vadd.f32 %v477, %v479
        %v481 = vmul.f32 %v478, %v465
        %v482 = vmul.f32 %v478, %v466
        %v483 = vmul.f32 %v478, %v467
        %v484 = vmul.f32 %v478, %v468
        %v485 = vadd.f32 %v461, %v481
        %v486 = vadd.f32 %v462, %v482
        %v487 = vadd.f32 %v463, %v483
        %v488 = vadd.f32 %v464, %v484
        %490 = vset.pattern.permute.xlu0 0
        %491 = vperm.xlu0 %490, %v485
        %v492 = vpop.permute.xlu0 %491
        %495 = vset.pattern.permute.xlu0 0
        %496 = vperm.xlu0 %495, %v486
        %v497 = vpop.permute.xlu0 %496
        %500 = vset.pattern.permute.xlu0 0
        %501 = vperm.xlu0 %500, %v487
        %v502 = vpop.permute.xlu0 %501
        %505 = vset.pattern.permute.xlu0 0
        %506 = vperm.xlu0 %505, %v488
        %v507 = vpop.permute.xlu0 %506
        %vm509 = vcmask 31744
        %v511 = vsel %vm509, %v457, 0
        %v514 = vsel %vm509, %v458, 0
        %v517 = vsel %vm509, %v459, 0
        %v520 = vsel %vm509, %v460, 0
        %vm522 = vcmask 1043456
        %v524 = vsel %vm522, %v480, 0
        %526 = vmatprep.subr.mxu0 0.0
        %527 = vmatpush1.msra.mxu0 %v524
        %528 = vmatprep.subr.mxu0 0.0
        %529 = vmatpush1.msra.mxu0 0.0
        %530 = vmatprep.subr.mxu0 0.0
        %531 = vmatpush1.msra.mxu0 0.0
        %532 = vmatprep.subr.mxu0 0.0
        %533 = vmatpush1.msra.mxu0 0.0
        %534 = vmatprep.subr.mxu0 0.0
        %535 = vmatpush1.msra.mxu0 0.0
        %536 = vmatprep.subr.mxu0 0.0
        %537 = vmatpush1.msra.mxu0 0.0
        %538 = vmatprep.subr.mxu0 0.0
        %539 = vmatpush1.msra.mxu0 0.0
        %540 = vmatprep.subr.mxu0 0.0
        %541 = vmatpush1.msra.mxu0 0.0
        %542 = vmatprep.subr.mxu0 0.0
        %543 = vmatpush1.msra.mxu0 0.0
        %544 = vmatprep.subr.mxu0 0.0
        %545 = vmatpush1.msra.mxu0 0.0
        %546 = vmatprep.subr.mxu0 0.0
        %547 = vmatpush1.msra.mxu0 0.0
        %548 = vmatprep.subr.mxu0 0.0
        %549 = vmatpush1.msra.mxu0 0.0
        %550 = vmatprep.subr.mxu0 0.0
        %551 = vmatpush1.msra.mxu0 0.0
        %552 = vmatprep.subr.mxu0 0.0
        %553 = vmatpush1.msra.mxu0 0.0
        %554 = vmatprep.subr.mxu0 0.0
        %555 = vmatpush1.msra.mxu0 0.0
        %556 = vmatprep.subr.mxu0 0.0
        %557 = vmatpush1.msra.mxu0 0.0
        %558 = vmatprep.subr.mxu0 0.0
        %559 = vmatpush1.msra.mxu0 0.0
        %560 = vmatprep.subr.mxu0 0.0
        %561 = vmatpush1.msra.mxu0 0.0
        %562 = vmatprep.subr.mxu0 0.0
        %563 = vmatpush1.msra.mxu0 0.0
        %564 = vmatprep.subr.mxu0 0.0
        %565 = vmatpush1.msra.mxu0 0.0
        %566 = vmatprep.subr.mxu0 0.0
        %567 = vmatpush1.msra.mxu0 0.0
        %568 = vmatprep.subr.mxu0 0.0
        %569 = vmatpush1.msra.mxu0 0.0
        %570 = vmatprep.subr.mxu0 0.0
        %571 = vmatpush1.msra.mxu0 0.0
        %572 = vmatprep.subr.mxu0 0.0
        %573 = vmatpush1.msra.mxu0 0.0
        %574 = vmatprep.subr.mxu0 0.0
        %575 = vmatpush1.msra.mxu0 0.0
        %576 = vmatprep.subr.mxu0 0.0
        %577 = vmatpush1.msra.mxu0 0.0
        %578 = vmatprep.subr.mxu0 0.0
        %579 = vmatpush1.msra.mxu0 0.0
        %580 = vmatprep.subr.mxu0 0.0
        %581 = vmatpush1.msra.mxu0 0.0
        %582 = vmatprep.subr.mxu0 0.0
        %583 = vmatpush1.msra.mxu0 0.0
        %584 = vmatprep.subr.mxu0 0.0
        %585 = vmatpush1.msra.mxu0 0.0
        %586 = vmatprep.subr.mxu0 0.0
        %587 = vmatpush1.msra.mxu0 0.0
        %588 = vmatprep.subr.mxu0 0.0
        %589 = vmatpush1.msra.mxu0 0.0
        %590 = vmatprep.mubr.f32.mxu0 0.0
        %591 = vmatmul.mubr.f32.gmra.mrb[0].mxu0 %v511
        %v592 = vpop.f32.mrb[0].mxu0
        %v593 = vadd.f32 %v492, %v592
        %v594 = vpop.f32.mrb[0].mxu0
        %595 = vmatprep.mubr.f32.mxu0 0.0
        %596 = vmatmul.mubr.f32.gmra.mrb[0].mxu0 %v514
        %v597 = vpop.f32.mrb[0].mxu0
        %v598 = vadd.f32 %v497, %v597
        %v599 = vpop.f32.mrb[0].mxu0
        %600 = vmatprep.mubr.f32.mxu0 0.0
        %601 = vmatmul.mubr.f32.gmra.mrb[0].mxu0 %v517
        %v602 = vpop.f32.mrb[0].mxu0
        %v603 = vadd.f32 %v502, %v602
        %v604 = vpop.f32.mrb[0].mxu0
        %605 = vmatprep.mubr.f32.mxu0 0.0
        %606 = vmatmul.mubr.f32.gmra.mrb[0].mxu0 %v520
        %v607 = vpop.f32.mrb[0].mxu0
        %v608 = vadd.f32 %v507, %v607
        %v609 = vpop.f32.mrb[0].mxu0
        %610 = vdwg.mxu0
        %v611 = vxor.u32 %v593, 2147483648
        %v612 = vxor.u32 %v598, 2147483648
        %v613 = vxor.u32 %v603, 2147483648
        %v614 = vxor.u32 %v608, 2147483648
        %v615 = vmul.f32 %v611, 1.442695
        %v616 = vpow.pop %v615
        %v617 = vmul.f32 %v612, 1.442695
        %v618 = vpow.pop %v617
        %v619 = vmul.f32 %v613, 1.442695
        %v620 = vpow.pop %v619
        %v621 = vmul.f32 %v614, 1.442695
        %v622 = vpow.pop %v621
        %v623 = vadd.f32 %v616, 1.0
        %v624 = vadd.f32 %v618, 1.0
        %v625 = vadd.f32 %v620, 1.0
        %v626 = vadd.f32 %v622, 1.0
        %v627 = vrcp.pop %v623
        %v628 = vmul.f32 1.0, %v627
        %v629 = vrcp.pop %v624
        %v630 = vmul.f32 1.0, %v629
        %v631 = vrcp.pop %v625
        %v632 = vmul.f32 1.0, %v631
        %v633 = vrcp.pop %v626
        %v634 = vmul.f32 1.0, %v633
        %v635 = vmul.f32 %v593, %v628
        %v636 = vmul.f32 %v598, %v630
        %v637 = vmul.f32 %v603, %v632
        %v638 = vmul.f32 %v608, %v634
        %640 = vset.pattern.permute.xlu0 0
        %641 = vperm.xlu0 %640, %v470
        %v642 = vpop.permute.xlu0 %641
        %vm644 = vcmask 261120
        %v646 = vsel %vm644, %v469, 0
        %648 = vmatprep.subr.mxu0 0.0
        %649 = vmatpush1.msra.mxu0 %v635
        %650 = vmatprep.subr.mxu0 0.0
        %651 = vmatpush1.msra.mxu0 %v636
        %652 = vmatprep.subr.mxu0 0.0
        %653 = vmatpush1.msra.mxu0 %v637
        %654 = vmatprep.subr.mxu0 0.0
        %655 = vmatpush1.msra.mxu0 %v638
        %656 = vmatprep.subr.mxu0 0.0
        %657 = vmatpush1.msra.mxu0 0.0
        %658 = vmatprep.subr.mxu0 0.0
        %659 = vmatpush1.msra.mxu0 0.0
        %660 = vmatprep.subr.mxu0 0.0
        %661 = vmatpush1.msra.mxu0 0.0
        %662 = vmatprep.subr.mxu0 0.0
        %663 = vmatpush1.msra.mxu0 0.0
        %664 = vmatprep.subr.mxu0 0.0
        %665 = vmatpush1.msra.mxu0 0.0
        %666 = vmatprep.subr.mxu0 0.0
        %667 = vmatpush1.msra.mxu0 0.0
        %668 = vmatprep.subr.mxu0 0.0
        %669 = vmatpush1.msra.mxu0 0.0
        %670 = vmatprep.subr.mxu0 0.0
        %671 = vmatpush1.msra.mxu0 0.0
        %672 = vmatprep.subr.mxu0 0.0
        %673 = vmatpush1.msra.mxu0 0.0
        %674 = vmatprep.subr.mxu0 0.0
        %675 = vmatpush1.msra.mxu0 0.0
        %676 = vmatprep.subr.mxu0 0.0
        %677 = vmatpush1.msra.mxu0 0.0
        %678 = vmatprep.subr.mxu0 0.0
        %679 = vmatpush1.msra.mxu0 0.0
        %680 = vmatprep.subr.mxu0 0.0
        %681 = vmatpush1.msra.mxu0 0.0
        %682 = vmatprep.subr.mxu0 0.0
        %683 = vmatpush1.msra.mxu0 0.0
        %684 = vmatprep.subr.mxu0 0.0
        %685 = vmatpush1.msra.mxu0 0.0
        %686 = vmatprep.subr.mxu0 0.0
        %687 = vmatpush1.msra.mxu0 0.0
        %688 = vmatprep.subr.mxu0 0.0
        %689 = vmatpush1.msra.mxu0 0.0
        %690 = vmatprep.subr.mxu0 0.0
        %691 = vmatpush1.msra.mxu0 0.0
        %692 = vmatprep.subr.mxu0 0.0
        %693 = vmatpush1.msra.mxu0 0.0
        %694 = vmatprep.subr.mxu0 0.0
        %695 = vmatpush1.msra.mxu0 0.0
        %696 = vmatprep.subr.mxu0 0.0
        %697 = vmatpush1.msra.mxu0 0.0
        %698 = vmatprep.subr.mxu0 0.0
        %699 = vmatpush1.msra.mxu0 0.0
        %700 = vmatprep.subr.mxu0 0.0
        %701 = vmatpush1.msra.mxu0 0.0
        %702 = vmatprep.subr.mxu0 0.0
        %703 = vmatpush1.msra.mxu0 0.0
        %704 = vmatprep.subr.mxu0 0.0
        %705 = vmatpush1.msra.mxu0 0.0
        %706 = vmatprep.subr.mxu0 0.0
        %707 = vmatpush1.msra.mxu0 0.0
        %708 = vmatprep.subr.mxu0 0.0
        %709 = vmatpush1.msra.mxu0 0.0
        %710 = vmatprep.subr.mxu0 0.0
        %711 = vmatpush1.msra.mxu0 0.0
        %712 = vmatprep.mubr.f32.mxu0 0.0
        %713 = vmatmul.mubr.f32.gmra.mrb[0].mxu0 %v646
        %v714 = vpop.f32.mrb[0].mxu0
        %v715 = vadd.f32 %v642, %v714
        %v716 = vpop.f32.mrb[0].mxu0
        %717 = vdwg.mxu0
        %v718 = vsub.f32 %v474, %v473
        %v719 = vsub.f32 %v718, %v715
        %v720 = vmul.f32 %v719, %v719
        %v721 = vadd.f32 %v720, 0.0
        %s722 = sadd.s32 %s471, 1
        %s723 = sld [smem:[#allocation2 + %s722]]
        %s724 = scalar_lea.vmem %s411, 4 [#allocation5]
        %v725 = vld [vmem:[%s724] sm:$0xf]
        %s726 = scalar_lea.vmem %s418, 4 [#allocation6]
        %v727 = vld [vmem:[%s726] sm:$0xf]
        %s728 = ssub.f32 1.0, %s723
        %v729 = vstv %s728
        %v730 = vmul.f32 %v725, %v729
        %v731 = vstv %s723
        %v732 = vmul.f32 %v727, %v731
        %v733 = vadd.f32 %v730, %v732
        %v734 = vmul.f32 %v731, %v465
        %v735 = vmul.f32 %v731, %v466
        %v736 = vmul.f32 %v731, %v467
        %v737 = vmul.f32 %v731, %v468
        %v738 = vadd.f32 %v461, %v734
        %v739 = vadd.f32 %v462, %v735
        %v740 = vadd.f32 %v463, %v736
        %v741 = vadd.f32 %v464, %v737
        %743 = vset.pattern.permute.xlu0 0
        %744 = vperm.xlu0 %743, %v738
        %v745 = vpop.permute.xlu0 %744
        %748 = vset.pattern.permute.xlu0 0
        %749 = vperm.xlu0 %748, %v739
        %v750 = vpop.permute.xlu0 %749
        %753 = vset.pattern.permute.xlu0 0
        %754 = vperm.xlu0 %753, %v740
        %v755 = vpop.permute.xlu0 %754
        %758 = vset.pattern.permute.xlu0 0
        %759 = vperm.xlu0 %758, %v741
        %v760 = vpop.permute.xlu0 %759
        %v763 = vsel %vm522, %v733, 0
        %765 = vmatprep.subr.mxu0 0.0
        %766 = vmatpush1.msra.mxu0 %v763
        %767 = vmatprep.subr.mxu0 0.0
        %768 = vmatpush1.msra.mxu0 0.0
        %769 = vmatprep.subr.mxu0 0.0
        %770 = vmatpush1.msra.mxu0 0.0
        %771 = vmatprep.subr.mxu0 0.0
        %772 = vmatpush1.msra.mxu0 0.0
        %773 = vmatprep.subr.mxu0 0.0
        %774 = vmatpush1.msra.mxu0 0.0
        %775 = vmatprep.subr.mxu0 0.0
        %776 = vmatpush1.msra.mxu0 0.0
        %777 = vmatprep.subr.mxu0 0.0
        %778 = vmatpush1.msra.mxu0 0.0
        %779 = vmatprep.subr.mxu0 0.0
        %780 = vmatpush1.msra.mxu0 0.0
        %781 = vmatprep.subr.mxu0 0.0
        %782 = vmatpush1.msra.mxu0 0.0
        %783 = vmatprep.subr.mxu0 0.0
        %784 = vmatpush1.msra.mxu0 0.0
        %785 = vmatprep.subr.mxu0 0.0
        %786 = vmatpush1.msra.mxu0 0.0
        %787 = vmatprep.subr.mxu0 0.0
        %788 = vmatpush1.msra.mxu0 0.0
        %789 = vmatprep.subr.mxu0 0.0
        %790 = vmatpush1.msra.mxu0 0.0
        %791 = vmatprep.subr.mxu0 0.0
        %792 = vmatpush1.msra.mxu0 0.0
        %793 = vmatprep.subr.mxu0 0.0
        %794 = vmatpush1.msra.mxu0 0.0
        %795 = vmatprep.subr.mxu0 0.0
        %796 = vmatpush1.msra.mxu0 0.0
        %797 = vmatprep.subr.mxu0 0.0
        %798 = vmatpush1.msra.mxu0 0.0
        %799 = vmatprep.subr.mxu0 0.0
        %800 = vmatpush1.msra.mxu0 0.0
        %801 = vmatprep.subr.mxu0 0.0
        %802 = vmatpush1.msra.mxu0 0.0
        %803 = vmatprep.subr.mxu0 0.0
        %804 = vmatpush1.msra.mxu0 0.0
        %805 = vmatprep.subr.mxu0 0.0
        %806 = vmatpush1.msra.mxu0 0.0
        %807 = vmatprep.subr.mxu0 0.0
        %808 = vmatpush1.msra.mxu0 0.0
        %809 = vmatprep.subr.mxu0 0.0
        %810 = vmatpush1.msra.mxu0 0.0
        %811 = vmatprep.subr.mxu0 0.0
        %812 = vmatpush1.msra.mxu0 0.0
        %813 = vmatprep.subr.mxu0 0.0
        %814 = vmatpush1.msra.mxu0 0.0
        %815 = vmatprep.subr.mxu0 0.0
        %816 = vmatpush1.msra.mxu0 0.0
        %817 = vmatprep.subr.mxu0 0.0
        %818 = vmatpush1.msra.mxu0 0.0
        %819 = vmatprep.subr.mxu0 0.0
        %820 = vmatpush1.msra.mxu0 0.0
        %821 = vmatprep.subr.mxu0 0.0
        %822 = vmatpush1.msra.mxu0 0.0
        %823 = vmatprep.subr.mxu0 0.0
        %824 = vmatpush1.msra.mxu0 0.0
        %825 = vmatprep.subr.mxu0 0.0
        %826 = vmatpush1.msra.mxu0 0.0
        %827 = vmatprep.subr.mxu0 0.0
        %828 = vmatpush1.msra.mxu0 0.0
        %829 = vmatprep.mubr.f32.mxu0 0.0
        %830 = vmatmul.mubr.f32.gmra.mrb[0].mxu0 %v511
        %v831 = vpop.f32.mrb[0].mxu0
        %v832 = vadd.f32 %v745, %v831
        %v833 = vpop.f32.mrb[0].mxu0
        %834 = vmatprep.mubr.f32.mxu0 0.0
        %835 = vmatmul.mubr.f32.gmra.mrb[0].mxu0 %v514
        %v836 = vpop.f32.mrb[0].mxu0
        %v837 = vadd.f32 %v750, %v836
        %v838 = vpop.f32.mrb[0].mxu0
        %839 = vmatprep.mubr.f32.mxu0 0.0
        %840 = vmatmul.mubr.f32.gmra.mrb[0].mxu0 %v517
        %v841 = vpop.f32.mrb[0].mxu0
        %v842 = vadd.f32 %v755, %v841
        %v843 = vpop.f32.mrb[0].mxu0
        %844 = vmatprep.mubr.f32.mxu0 0.0
        %845 = vmatmul.mubr.f32.gmra.mrb[0].mxu0 %v520
        %v846 = vpop.f32.mrb[0].mxu0
        %v847 = vadd.f32 %v760, %v846
        %v848 = vpop.f32.mrb[0].mxu0
        %849 = vdwg.mxu0
        %v850 = vxor.u32 %v832, 2147483648
        %v851 = vxor.u32 %v837, 2147483648
        %v852 = vxor.u32 %v842, 2147483648
        %v853 = vxor.u32 %v847, 2147483648
        %v854 = vmul.f32 %v850, 1.442695
        %v855 = vpow.pop %v854
        %v856 = vmul.f32 %v851, 1.442695
        %v857 = vpow.pop %v856
        %v858 = vmul.f32 %v852, 1.442695
        %v859 = vpow.pop %v858
        %v860 = vmul.f32 %v853, 1.442695
        %v861 = vpow.pop %v860
        %v862 = vadd.f32 %v855, 1.0
        %v863 = vadd.f32 %v857, 1.0
        %v864 = vadd.f32 %v859, 1.0
        %v865 = vadd.f32 %v861, 1.0
        %v866 = vrcp.pop %v862
        %v867 = vmul.f32 1.0, %v866
        %v868 = vrcp.pop %v863
        %v869 = vmul.f32 1.0, %v868
        %v870 = vrcp.pop %v864
        %v871 = vmul.f32 1.0, %v870
        %v872 = vrcp.pop %v865
        %v873 = vmul.f32 1.0, %v872
        %v874 = vmul.f32 %v832, %v867
        %v875 = vmul.f32 %v837, %v869
        %v876 = vmul.f32 %v842, %v871
        %v877 = vmul.f32 %v847, %v873
        %878 = vmatprep.subr.mxu0 0.0
        %879 = vmatpush1.msra.mxu0 %v874
        %880 = vmatprep.subr.mxu0 0.0
        %881 = vmatpush1.msra.mxu0 %v875
        %882 = vmatprep.subr.mxu0 0.0
        %883 = vmatpush1.msra.mxu0 %v876
        %884 = vmatprep.subr.mxu0 0.0
        %885 = vmatpush1.msra.mxu0 %v877
        %886 = vmatprep.subr.mxu0 0.0
        %887 = vmatpush1.msra.mxu0 0.0
        %888 = vmatprep.subr.mxu0 0.0
        %889 = vmatpush1.msra.mxu0 0.0
        %890 = vmatprep.subr.mxu0 0.0
        %891 = vmatpush1.msra.mxu0 0.0
        %892 = vmatprep.subr.mxu0 0.0
        %893 = vmatpush1.msra.mxu0 0.0
        %894 = vmatprep.subr.mxu0 0.0
        %895 = vmatpush1.msra.mxu0 0.0
        %896 = vmatprep.subr.mxu0 0.0
        %897 = vmatpush1.msra.mxu0 0.0
        %898 = vmatprep.subr.mxu0 0.0
        %899 = vmatpush1.msra.mxu0 0.0
        %900 = vmatprep.subr.mxu0 0.0
        %901 = vmatpush1.msra.mxu0 0.0
        %902 = vmatprep.subr.mxu0 0.0
        %903 = vmatpush1.msra.mxu0 0.0
        %904 = vmatprep.subr.mxu0 0.0
        %905 = vmatpush1.msra.mxu0 0.0
        %906 = vmatprep.subr.mxu0 0.0
        %907 = vmatpush1.msra.mxu0 0.0
        %908 = vmatprep.subr.mxu0 0.0
        %909 = vmatpush1.msra.mxu0 0.0
        %910 = vmatprep.subr.mxu0 0.0
        %911 = vmatpush1.msra.mxu0 0.0
        %912 = vmatprep.subr.mxu0 0.0
        %913 = vmatpush1.msra.mxu0 0.0
        %914 = vmatprep.subr.mxu0 0.0
        %915 = vmatpush1.msra.mxu0 0.0
        %916 = vmatprep.subr.mxu0 0.0
        %917 = vmatpush1.msra.mxu0 0.0
        %918 = vmatprep.subr.mxu0 0.0
        %919 = vmatpush1.msra.mxu0 0.0
        %920 = vmatprep.subr.mxu0 0.0
        %921 = vmatpush1.msra.mxu0 0.0
        %922 = vmatprep.subr.mxu0 0.0
        %923 = vmatpush1.msra.mxu0 0.0
        %924 = vmatprep.subr.mxu0 0.0
        %925 = vmatpush1.msra.mxu0 0.0
        %926 = vmatprep.subr.mxu0 0.0
        %927 = vmatpush1.msra.mxu0 0.0
        %928 = vmatprep.subr.mxu0 0.0
        %929 = vmatpush1.msra.mxu0 0.0
        %930 = vmatprep.subr.mxu0 0.0
        %931 = vmatpush1.msra.mxu0 0.0
        %932 = vmatprep.subr.mxu0 0.0
        %933 = vmatpush1.msra.mxu0 0.0
        %934 = vmatprep.subr.mxu0 0.0
        %935 = vmatpush1.msra.mxu0 0.0
        %936 = vmatprep.subr.mxu0 0.0
        %937 = vmatpush1.msra.mxu0 0.0
        %938 = vmatprep.subr.mxu0 0.0
        %939 = vmatpush1.msra.mxu0 0.0
        %940 = vmatprep.subr.mxu0 0.0
        %941 = vmatpush1.msra.mxu0 0.0
        %942 = vmatprep.mubr.f32.mxu0 0.0
        %943 = vmatmul.mubr.f32.gmra.mrb[0].mxu0 %v646
        %v944 = vpop.f32.mrb[0].mxu0
        %v945 = vadd.f32 %v642, %v944
        %v946 = vpop.f32.mrb[0].mxu0
        %947 = vdwg.mxu0
        %v948 = vsub.f32 %v727, %v725
        %v949 = vsub.f32 %v948, %v945
        %v950 = vmul.f32 %v949, %v949
        %v951 = vadd.f32 %v721, %v950
        %v952 = vadd.f32 %v951, 0.0
        %v953 = vsel %vm522, %v952, 0.0
        %v954 = vrot.slane %v953, 4
        %v955 = vadd.f32 %v953, %v954
        %v956 = vrot.slane %v955, 2
        %v957 = vadd.f32 %v955, %v956
        %v958 = vrot.slane %v957, 1
        %v959 = vadd.f32 %v957, %v958
        %960 = vst [vmem:[%s452] sm:$0x1] %v959
        %s961 = sand.u32 %s229, 1
        %s962 = scalar_lea.sflag [#allocation3], %s961
        %s963 = sand.u32 %s229, 1
        %s964 = scalar_lea.vmem [#allocation7], %s963
        // Predicated region
        $region139: #{tpu_custom_call.1} parent=125 // pred_check
          %p965 = pneg %p239
        $region140: #{tpu_custom_call.1} parent=125 // pred_check_branch
          %967 = sbr.rel (%p965) target = $region142
        $region141: #{tpu_custom_call.1} parent=125 // pred_region
          %s968 = smul.u32 %s27, 2
          %s969 = sadd.s32 %s968, %s28
          %s971 = ssub.s32 16, 16
          %972 = vsyncadd %s962, %s971
          %s973 = smul.addr %s969, 16
          %s974 = scalar_lea.hbm %s8, %s973
          %s976 = sshll.u32 %s964, 4
          %s977 = int_to_ptr.vmem [resolvable:$true] %s976
          %979 = dma.vmem_to_hbm [thread:$0]  %s977, 16, %s974, %s962
        $region142: #{tpu_custom_call.1} parent=125 // pred_fallthru
          _
      $region126: #{tpu_custom_call.1} parent=5 // pred_fallthru
        _
      %p980 = scmp.le.s32.totalorder 2, %s18
      // Predicated region
      $region143: #{tpu_custom_call.1} parent=5 // pred_check
        %p981 = pneg %p980
      $region144: #{tpu_custom_call.1} parent=5 // pred_check_branch
        %983 = sbr.rel (%p981) target = $region146
      $region145: #{tpu_custom_call.1} parent=5 // pred_region
        %s984 = ssub.s32 %s18, 2
        // Predicated region
        $region147: #{tpu_custom_call.1} parent=145 // pred_check
          %p985 = pneg %p245
        $region148: #{tpu_custom_call.1} parent=145 // pred_check_branch
          %987 = sbr.rel (%p985) target = $region150
        $region149: #{tpu_custom_call.1} parent=145 // pred_region
          %s988 = sand.u32 %s230, 1
          %s989 = scalar_lea.sflag [#allocation3], %s988
          %s990 = sand.u32 %s230, 1
          %s991 = scalar_lea.vmem [#allocation7], %s990
          %992 = dma.done %s989, 16
        $region150: #{tpu_custom_call.1} parent=145 // pred_fallthru
          _
      $region146: #{tpu_custom_call.1} parent=5 // pred_fallthru
        _
    $region6: #{tpu_custom_call.1} parent=1 // loop_footer
      %s22 = sadd.s32 1, %s18
    $region7: #{tpu_custom_call.1} parent=1 // loop_footer_branch
      %17 = sbr.rel target = $region3
    $region8: #{tpu_custom_call.1} parent=1 // loop_exit
      _
    %993 = vsyncpa [#allocation3], 1
    %s994 = scalar_lea.sflag [#allocation3], 1
    %995 = vsyncpa %s994, 1
    %996 = vsyncpa [#allocation4], 1
    %s997 = scalar_lea.sflag [#allocation4], 1
    %998 = vsyncpa %s997, 1

</llo_original>
